<compile_context>
chip_gen: v6e
topology: v6e:2x2x1
jax: 0.10.0
libtpu: 0.0.40
codegen_flags: <defaults>
</compile_context>

<pallas_src>
import jax
import jax.numpy as jnp
from jax.experimental import pallas as pl
from jax.experimental.pallas import tpu as pltpu

# num_classes = max_val - min_val + 1 ; pick min_val=1, max_val=10 deterministically
MIN_VAL = 1
MAX_VAL = 10
NUM_CLASSES = MAX_VAL - MIN_VAL + 1  # 10

H1 = 64          # logical hidden 1
H2 = 128         # hidden 2 (already lane-dense)
H1_PAD = 128     # lane-dense padded hidden 1
OUT_PAD = 128    # lane-dense padded output


def _round_up(n, m):
    return ((n + m - 1) // m) * m


def mlp_kernel(x_ref, w1_ref, b1_ref, w2_ref, b2_ref, w3_ref, b3_ref, out_ref):
    # x: (TB, 1); w1/b1: (1, H1_PAD); w2: (H1_PAD, H2); b2: (1, H2);
    # w3: (H2, OUT_PAD); b3: (1, OUT_PAD); out: (TB, OUT_PAD)
    x = x_ref[...]

    # Layer 1: K=1 "matmul" is just an outer product -> pure VPU broadcast FMA + ReLU.
    h1 = jnp.maximum(x * w1_ref[...] + b1_ref[...], 0.0)          # (TB, H1_PAD)

    # Layer 2: real MXU matmul, f32 accumulate, ReLU epilogue on VPU.
    h2 = jnp.dot(h1, w2_ref[...], preferred_element_type=jnp.float32) + b2_ref[...]
    h2 = jnp.maximum(h2, 0.0)                                     # (TB, H2)

    # Layer 3: lane-dense (padded) output; padded columns are exactly zero.
    out = jnp.dot(h2, w3_ref[...], preferred_element_type=jnp.float32) + b3_ref[...]
    out_ref[...] = out.astype(out_ref.dtype)                      # (TB, OUT_PAD)


def random_number_generator_forward(x, padded_params, *, block_b=512):
    """x: (B, 1) f32.  padded_params: see pad_params().  Returns (B, NUM_CLASSES)."""
    w1, b1, w2, b2, w3, b3 = padded_params
    B = x.shape[0]

    # Batch tile: multiple of 8 sublanes (f32); single step for small B.
    TB = min(block_b, _round_up(B, 8))
    B_pad = _round_up(B, TB)
    if B_pad != B:
        x = jnp.pad(x, ((0, B_pad - B), (0, 0)))

    grid = (B_pad // TB,)

    out = pl.pallas_call(
        mlp_kernel,
        out_shape=jax.ShapeDtypeStruct((B_pad, OUT_PAD), jnp.float32),
        grid=grid,
        in_specs=[
            pl.BlockSpec((TB, 1), lambda i: (i, 0)),          # x: tiled over batch
            pl.BlockSpec((1, H1_PAD), lambda i: (0, 0)),      # w1 (VMEM-resident)
            pl.BlockSpec((1, H1_PAD), lambda i: (0, 0)),      # b1
            pl.BlockSpec((H1_PAD, H2), lambda i: (0, 0)),     # w2
            pl.BlockSpec((1, H2), lambda i: (0, 0)),          # b2
            pl.BlockSpec((H2, OUT_PAD), lambda i: (0, 0)),    # w3
            pl.BlockSpec((1, OUT_PAD), lambda i: (0, 0)),     # b3
        ],
        out_specs=pl.BlockSpec((TB, OUT_PAD), lambda i: (i, 0)),
        compiler_params=pltpu.CompilerParams(
            dimension_semantics=("parallel",)),
    )(x, w1, b1, w2, b2, w3, b3)

    return out[:B, :NUM_CLASSES]


def init_params(key):
    """Logical (unpadded) params, mimicking nn.Linear default init
    (uniform +/- 1/sqrt(fan_in)); weights stored as (in, out)."""
    k1, k2, k3, k4, k5, k6 = jax.random.split(key, 6)

    def lin(kw, kb, fan_in, fan_out):
        bound = 1.0 / jnp.sqrt(float(fan_in))
        w = jax.random.uniform(kw, (fan_in, fan_out), jnp.float32, -bound, bound)
        b = jax.random.uniform(kb, (1, fan_out), jnp.float32, -bound, bound)
        return w, b

    w1, b1 = lin(k1, k2, 1, H1)
    w2, b2 = lin(k3, k4, H1, H2)
    w3, b3 = lin(k5, k6, H2, NUM_CLASSES)
    return (w1, b1, w2, b2, w3, b3)


def pad_params(params):
    """Zero-pad to lane-dense shapes.  Zero-padded h1 columns stay zero through
    the ReLU and hit zero rows of w2, and padded output columns are exactly
    zero, so the math is unchanged."""
    w1, b1, w2, b2, w3, b3 = params
    w1p = jnp.pad(w1, ((0, 0), (0, H1_PAD - H1)))           # (1, 128)
    b1p = jnp.pad(b1, ((0, 0), (0, H1_PAD - H1)))           # (1, 128)
    w2p = jnp.pad(w2, ((0, H1_PAD - H1), (0, 0)))           # (128, 128)
    b2p = b2                                                # (1, 128)
    w3p = jnp.pad(w3, ((0, 0), (0, OUT_PAD - NUM_CLASSES)))  # (128, 128)
    b3p = jnp.pad(b3, ((0, 0), (0, OUT_PAD - NUM_CLASSES)))  # (1, 128)
    return (w1p, b1p, w2p, b2p, w3p, b3p)


def reference_forward(x, params):
    w1, b1, w2, b2, w3, b3 = params
    h1 = jnp.maximum(x @ w1 + b1, 0.0)
    h2 = jnp.maximum(h1 @ w2 + b2, 0.0)
    return h2 @ w3 + b3


if __name__ == "__main__":
    key = jax.random.PRNGKey(0)
    kx, kp = jax.random.split(key)

    B = 8
    # Input: batch of scalars (B, 1), like the PyTorch module's Linear(1, 64) input.
    x = jax.random.uniform(kx, (B, 1), jnp.float32, float(MIN_VAL), float(MAX_VAL))

    params = init_params(kp)          # logical params (for the reference)
    padded = pad_params(params)       # lane-dense params (for the kernel)

    out = random_number_generator_forward(x, padded)
    out = jax.block_until_ready(out)

    ref = reference_forward(x, params)
    assert out.shape == (B, NUM_CLASSES)
    assert jnp.allclose(out, ref, atol=1e-5, rtol=1e-5)

    print("KERNEL_OK")
</pallas_src>

<mosaic_0001>
module attributes {stable_mosaic.version = 11 : i64} {
  func.func @mlp_kernel(%arg0: i32, %arg1: memref<8x1xf32, #tpu.memory_space<vmem>>, %arg2: memref<1x128xf32, #tpu.memory_space<vmem>>, %arg3: memref<1x128xf32, #tpu.memory_space<vmem>>, %arg4: memref<128x128xf32, #tpu.memory_space<vmem>>, %arg5: memref<1x128xf32, #tpu.memory_space<vmem>>, %arg6: memref<128x128xf32, #tpu.memory_space<vmem>>, %arg7: memref<1x128xf32, #tpu.memory_space<vmem>>, %arg8: memref<8x128xf32, #tpu.memory_space<vmem>>) attributes {dimension_semantics = [#tpu.dimension_semantics<parallel>], iteration_bounds = array<i64: 1>, scalar_prefetch = 0 : i64, scratch_operands = 0 : i64, tpu.core_type = #tpu.core_type<tc>, window_params = [{transform_indices = @transform_0, window_bounds = array<i64: 8, 1>}, {pipeline_mode = #tpu.pipeline_mode<synchronous>, transform_indices = @transform_1, window_bounds = array<i64: 1, 128>}, {pipeline_mode = #tpu.pipeline_mode<synchronous>, transform_indices = @transform_2, window_bounds = array<i64: 1, 128>}, {pipeline_mode = #tpu.pipeline_mode<synchronous>, transform_indices = @transform_3, window_bounds = array<i64: 128, 128>}, {pipeline_mode = #tpu.pipeline_mode<synchronous>, transform_indices = @transform_4, window_bounds = array<i64: 1, 128>}, {pipeline_mode = #tpu.pipeline_mode<synchronous>, transform_indices = @transform_5, window_bounds = array<i64: 128, 128>}, {pipeline_mode = #tpu.pipeline_mode<synchronous>, transform_indices = @transform_6, window_bounds = array<i64: 1, 128>}, {transform_indices = @transform_7, window_bounds = array<i64: 8, 128>}]} {
    %c0 = arith.constant 0 : index
    %c0_0 = arith.constant 0 : index
    %0 = vector.load %arg1[%c0, %c0_0] : memref<8x1xf32, #tpu.memory_space<vmem>>, vector<8x1xf32>
    %c0_1 = arith.constant 0 : index
    %c0_2 = arith.constant 0 : index
    %1 = vector.load %arg2[%c0_1, %c0_2] : memref<1x128xf32, #tpu.memory_space<vmem>>, vector<1x128xf32>
    %2 = vector.broadcast %0 : vector<8x1xf32> to vector<8x128xf32>
    %3 = vector.broadcast %1 : vector<1x128xf32> to vector<8x128xf32>
    %4 = arith.mulf %2, %3 : vector<8x128xf32>
    %c0_3 = arith.constant 0 : index
    %c0_4 = arith.constant 0 : index
    %5 = vector.load %arg3[%c0_3, %c0_4] : memref<1x128xf32, #tpu.memory_space<vmem>>, vector<1x128xf32>
    %6 = vector.broadcast %5 : vector<1x128xf32> to vector<8x128xf32>
    %7 = arith.addf %4, %6 : vector<8x128xf32>
    %cst = arith.constant 0.000000e+00 : f32
    %8 = vector.broadcast %cst : f32 to vector<8x128xf32>
    %9 = arith.maximumf %7, %8 : vector<8x128xf32>
    %c0_5 = arith.constant 0 : index
    %c0_6 = arith.constant 0 : index
    %10 = vector.load %arg4[%c0_5, %c0_6] : memref<128x128xf32, #tpu.memory_space<vmem>>, vector<128x128xf32>
    %cst_7 = arith.constant dense<0.000000e+00> : vector<8x128xf32>
    %11 = tpu.matmul %9, %10, %cst_7 {dimension_numbers = #tpu.dot_dimension_numbers<[1], [0], [0], [1], [0, 0, 1, 1], [], []>} : vector<8x128xf32>, vector<128x128xf32>, vector<8x128xf32> -> vector<8x128xf32>
    %c0_8 = arith.constant 0 : index
    %c0_9 = arith.constant 0 : index
    %12 = vector.load %arg5[%c0_8, %c0_9] : memref<1x128xf32, #tpu.memory_space<vmem>>, vector<1x128xf32>
    %13 = vector.broadcast %12 : vector<1x128xf32> to vector<8x128xf32>
    %14 = arith.addf %11, %13 : vector<8x128xf32>
    %cst_10 = arith.constant 0.000000e+00 : f32
    %15 = vector.broadcast %cst_10 : f32 to vector<8x128xf32>
    %16 = arith.maximumf %14, %15 : vector<8x128xf32>
    %c0_11 = arith.constant 0 : index
    %c0_12 = arith.constant 0 : index
    %17 = vector.load %arg6[%c0_11, %c0_12] : memref<128x128xf32, #tpu.memory_space<vmem>>, vector<128x128xf32>
    %cst_13 = arith.constant dense<0.000000e+00> : vector<8x128xf32>
    %18 = tpu.matmul %16, %17, %cst_13 {dimension_numbers = #tpu.dot_dimension_numbers<[1], [0], [0], [1], [0, 0, 1, 1], [], []>} : vector<8x128xf32>, vector<128x128xf32>, vector<8x128xf32> -> vector<8x128xf32>
    %c0_14 = arith.constant 0 : index
    %c0_15 = arith.constant 0 : index
    %19 = vector.load %arg7[%c0_14, %c0_15] : memref<1x128xf32, #tpu.memory_space<vmem>>, vector<1x128xf32>
    %20 = vector.broadcast %19 : vector<1x128xf32> to vector<8x128xf32>
    %21 = arith.addf %18, %20 : vector<8x128xf32>
    %c0_16 = arith.constant 0 : index
    %c0_17 = arith.constant 0 : index
    %22 = vector.load %arg8[%c0_16, %c0_17] : memref<8x128xf32, #tpu.memory_space<vmem>>, vector<8x128xf32>
    tpu.vector_store %arg8[%c0_16, %c0_17], %21 {strides = array<i32>} : memref<8x128xf32, #tpu.memory_space<vmem>>, vector<8x128xf32>,
    return
  }
  func.func @transform_0(%arg0: i32) -> (i32, i32) {
    %c0_i32 = arith.constant 0 : i32
    %c0_i32_0 = arith.constant 0 : i32
    return %arg0, %c0_i32 : i32, i32
  }
  func.func @transform_1(%arg0: i32) -> (i32, i32) {
    %c0_i32 = arith.constant 0 : i32
    %c0_i32_0 = arith.constant 0 : i32
    %c0_i32_1 = arith.constant 0 : i32
    return %c0_i32, %c0_i32_0 : i32, i32
  }
  func.func @transform_2(%arg0: i32) -> (i32, i32) {
    %c0_i32 = arith.constant 0 : i32
    %c0_i32_0 = arith.constant 0 : i32
    %c0_i32_1 = arith.constant 0 : i32
    return %c0_i32, %c0_i32_0 : i32, i32
  }
  func.func @transform_3(%arg0: i32) -> (i32, i32) {
    %c0_i32 = arith.constant 0 : i32
    %c0_i32_0 = arith.constant 0 : i32
    %c0_i32_1 = arith.constant 0 : i32
    return %c0_i32, %c0_i32_0 : i32, i32
  }
  func.func @transform_4(%arg0: i32) -> (i32, i32) {
    %c0_i32 = arith.constant 0 : i32
    %c0_i32_0 = arith.constant 0 : i32
    %c0_i32_1 = arith.constant 0 : i32
    return %c0_i32, %c0_i32_0 : i32, i32
  }
  func.func @transform_5(%arg0: i32) -> (i32, i32) {
    %c0_i32 = arith.constant 0 : i32
    %c0_i32_0 = arith.constant 0 : i32
    %c0_i32_1 = arith.constant 0 : i32
    return %c0_i32, %c0_i32_0 : i32, i32
  }
  func.func @transform_6(%arg0: i32) -> (i32, i32) {
    %c0_i32 = arith.constant 0 : i32
    %c0_i32_0 = arith.constant 0 : i32
    %c0_i32_1 = arith.constant 0 : i32
    return %c0_i32, %c0_i32_0 : i32, i32
  }
  func.func @transform_7(%arg0: i32) -> (i32, i32) {
    %c0_i32 = arith.constant 0 : i32
    %c0_i32_0 = arith.constant 0 : i32
    return %arg0, %c0_i32 : i32, i32
  }
}

</mosaic_0001>

<llo_original>
// kernel: tpu_custom_call.1
$region0: #{tpu_custom_call.1}
  #allocation0 [shape = 'u32[]', space=smem, size = 0x4, offset = 0x4, fixed_abs, tag = 'smem constant byte address 0x4 - core index']
  #allocation1 [shape = 'u32[144,128]{1,0:T(1,128)}', space=vmem, size = 0x12000, scoped, tag = 'internal scratch']
  %s0 = inlined_call_operand.vmem [shape: f32[8,1], index: 0, kind: input, shape index: {}]
  %s1 = inlined_call_operand.vmem [shape: f32[1,128], index: 1, kind: input, shape index: {}]
  %s2 = inlined_call_operand.vmem [shape: f32[1,128], index: 2, kind: input, shape index: {}]
  %s3 = inlined_call_operand.hbm [shape: f32[128,128], index: 3, kind: input, shape index: {}]
  %s4 = inlined_call_operand.vmem [shape: f32[1,128], index: 4, kind: input, shape index: {}]
  %s5 = inlined_call_operand.hbm [shape: f32[128,128], index: 5, kind: input, shape index: {}]
  %s6 = inlined_call_operand.vmem [shape: f32[1,128], index: 6, kind: input, shape index: {}]
  %s7 = inlined_call_operand.hbm [shape: f32[8,128], index: 7, kind: output, shape index: {}]
  %s8 = sld [smem:[#allocation0]]
  $region46: #{tpu_custom_call.1} parent=0
    _
  %s10 = ssub.s32 1, %s8
  %s11 = scalar_select 0, %s10, %s8
  $region1: #{tpu_custom_call.1} parent=0
    #allocation2 [shape = 'u8[65536]{0}', space=vmem, size = 0x10000, scoped, tag = 'input window, operand 3, single buffered']
    #allocation3 [shape = 's32[1]{0}', space=sflag, size = 0x4, scoped, tag = 'scoped memory for tpu_custom_call.1']
    #allocation4 [shape = 's32[1]{0}', space=sflag, size = 0x4, scoped, tag = 'scoped memory for tpu_custom_call.1']
    #allocation5 [shape = 'u8[65536]{0}', space=vmem, size = 0x10000, scoped, tag = 'input window, operand 5, single buffered']
    #allocation6 [shape = 's32[1]{0}', space=sflag, size = 0x4, scoped, tag = 'scoped memory for tpu_custom_call.1']
    #allocation7 [shape = 'u8[4096]{0}', space=vmem, size = 0x1000, scoped, tag = 'output window, operand 0, single buffered']
    %12 = vsyncpa [#allocation3], 0
    %13 = vsyncpa [#allocation6], 0
    %14 = vsyncpa [#allocation4], 0
    // Predicated region
    $region2: #{tpu_custom_call.1} parent=1 // pred_check
      _
    $region3: #{tpu_custom_call.1} parent=1 // pred_check_branch
      %16 = sbr.rel (0) target = $region5
    $region4: #{tpu_custom_call.1} parent=1 // pred_region
      _
    $region5: #{tpu_custom_call.1} parent=1 // pred_fallthru
      _
    // Predicated region
    $region6: #{tpu_custom_call.1} parent=1 // pred_check
      _
    $region7: #{tpu_custom_call.1} parent=1 // pred_check_branch
      %18 = sbr.rel (0) target = $region9
    $region8: #{tpu_custom_call.1} parent=1 // pred_region
      _
    $region9: #{tpu_custom_call.1} parent=1 // pred_fallthru
      _
    // Predicated region
    $region10: #{tpu_custom_call.1} parent=1 // pred_check
      _
    $region11: #{tpu_custom_call.1} parent=1 // pred_check_branch
      %20 = sbr.rel (0) target = $region13
    $region12: #{tpu_custom_call.1} parent=1 // pred_region
      _
    $region13: #{tpu_custom_call.1} parent=1 // pred_fallthru
      _
    // Predicated region
    $region14: #{tpu_custom_call.1} parent=1 // pred_check
      _
    $region15: #{tpu_custom_call.1} parent=1 // pred_check_branch
      %22 = sbr.rel (0) target = $region17
    $region16: #{tpu_custom_call.1} parent=1 // pred_region
      %s24 = ssub.s32 2048, 2048
      %25 = vsyncadd [#allocation3], %s24
      %s26 = sshll.u32 [#allocation2], 4
      %s27 = int_to_ptr.vmem [resolvable:$true] %s26
      %32 = dma.hbm_to_vmem [thread:$0]  %s3, 2048, %s27, [#allocation3], 128, 128, 8
    $region17: #{tpu_custom_call.1} parent=1 // pred_fallthru
      _
    // Predicated region
    $region18: #{tpu_custom_call.1} parent=1 // pred_check
      _
    $region19: #{tpu_custom_call.1} parent=1 // pred_check_branch
      %34 = sbr.rel (0) target = $region21
    $region20: #{tpu_custom_call.1} parent=1 // pred_region
      _
    $region21: #{tpu_custom_call.1} parent=1 // pred_fallthru
      _
    // Predicated region
    $region22: #{tpu_custom_call.1} parent=1 // pred_check
      _
    $region23: #{tpu_custom_call.1} parent=1 // pred_check_branch
      %36 = sbr.rel (0) target = $region25
    $region24: #{tpu_custom_call.1} parent=1 // pred_region
      %s38 = ssub.s32 2048, 2048
      %39 = vsyncadd [#allocation6], %s38
      %s40 = sshll.u32 [#allocation5], 4
      %s41 = int_to_ptr.vmem [resolvable:$true] %s40
      %46 = dma.hbm_to_vmem [thread:$0]  %s5, 2048, %s41, [#allocation6], 128, 128, 8
    $region25: #{tpu_custom_call.1} parent=1 // pred_fallthru
      _
    // Predicated region
    $region26: #{tpu_custom_call.1} parent=1 // pred_check
      _
    $region27: #{tpu_custom_call.1} parent=1 // pred_check_branch
      %48 = sbr.rel (0) target = $region29
    $region28: #{tpu_custom_call.1} parent=1 // pred_region
      _
    $region29: #{tpu_custom_call.1} parent=1 // pred_fallthru
      _
    // Predicated region
    $region30: #{tpu_custom_call.1} parent=1 // pred_check
      _
    $region31: #{tpu_custom_call.1} parent=1 // pred_check_branch
      %50 = sbr.rel (0) target = $region33
    $region32: #{tpu_custom_call.1} parent=1 // pred_region
      %51 = dma.done [#allocation3], 2048
    $region33: #{tpu_custom_call.1} parent=1 // pred_fallthru
      _
    // Predicated region
    $region34: #{tpu_custom_call.1} parent=1 // pred_check
      _
    $region35: #{tpu_custom_call.1} parent=1 // pred_check_branch
      %53 = sbr.rel (0) target = $region37
    $region36: #{tpu_custom_call.1} parent=1 // pred_region
      %54 = dma.done [#allocation6], 2048
    $region37: #{tpu_custom_call.1} parent=1 // pred_fallthru
      _
    %v55 = vld [vmem:[%s0] sm:$0xff]
    %v56 = vld [vmem:[%s1] sm:$0x1]
    %58 = vset.pattern.permute.xlu0 0
    %59 = vperm.xlu0 %58, %v55
    %v60 = vpop.permute.xlu0 %59
    %v63 = vlaneseq
    %v64 = vshrl.u32 %v63, 7
    %v65 = vsub.s32 0, %v64
    %v66 = vrot.slane %v56, %v65
    %v68 = vmul.f32 %v60, %v66
    %v69 = vld [vmem:[%s2] sm:$0x1]
    %v71 = vlaneseq
    %v72 = vshrl.u32 %v71, 7
    %v73 = vsub.s32 0, %v72
    %v74 = vrot.slane %v69, %v73
    %v76 = vadd.f32 %v68, %v74
    %v77 = vmax.f32 %v76, 0.0
    %v78 = vld [vmem:[#allocation2] sm:$0xff]
    %v79 = vld [vmem:[#allocation2 + $0x8] sm:$0xff]
    %v80 = vld [vmem:[#allocation2 + $0x10] sm:$0xff]
    %v81 = vld [vmem:[#allocation2 + $0x18] sm:$0xff]
    %v82 = vld [vmem:[#allocation2 + $0x20] sm:$0xff]
    %v83 = vld [vmem:[#allocation2 + $0x28] sm:$0xff]
    %v84 = vld [vmem:[#allocation2 + $0x30] sm:$0xff]
    %v85 = vld [vmem:[#allocation2 + $0x38] sm:$0xff]
    %v86 = vld [vmem:[#allocation2 + $0x40] sm:$0xff]
    %v87 = vld [vmem:[#allocation2 + $0x48] sm:$0xff]
    %v88 = vld [vmem:[#allocation2 + $0x50] sm:$0xff]
    %v89 = vld [vmem:[#allocation2 + $0x58] sm:$0xff]
    %v90 = vld [vmem:[#allocation2 + $0x60] sm:$0xff]
    %v91 = vld [vmem:[#allocation2 + $0x68] sm:$0xff]
    %v92 = vld [vmem:[#allocation2 + $0x70] sm:$0xff]
    %v93 = vld [vmem:[#allocation2 + $0x78] sm:$0xff]
    %v94 = vld [vmem:[%s4] sm:$0x1]
    %v96 = vlaneseq
    %v97 = vshrl.u32 %v96, 7
    %v98 = vsub.s32 0, %v97
    %v99 = vrot.slane %v94, %v98
    %101 = vmatprep.subr.mxu0 0.0
    %102 = vmatpush1.msra.mxu0 %v93
    %103 = vmatprep.subr.mxu0 0.0
    %104 = vmatpush1.msra.mxu0 %v92
    %105 = vmatprep.subr.mxu0 0.0
    %106 = vmatpush1.msra.mxu0 %v91
    %107 = vmatprep.subr.mxu0 0.0
    %108 = vmatpush1.msra.mxu0 %v90
    %109 = vmatprep.subr.mxu0 0.0
    %110 = vmatpush1.msra.mxu0 %v89
    %111 = vmatprep.subr.mxu0 0.0
    %112 = vmatpush1.msra.mxu0 %v88
    %113 = vmatprep.subr.mxu0 0.0
    %114 = vmatpush1.msra.mxu0 %v87
    %115 = vmatprep.subr.mxu0 0.0
    %116 = vmatpush1.msra.mxu0 %v86
    %117 = vmatprep.subr.mxu0 0.0
    %118 = vmatpush1.msra.mxu0 %v85
    %119 = vmatprep.subr.mxu0 0.0
    %120 = vmatpush1.msra.mxu0 %v84
    %121 = vmatprep.subr.mxu0 0.0
    %122 = vmatpush1.msra.mxu0 %v83
    %123 = vmatprep.subr.mxu0 0.0
    %124 = vmatpush1.msra.mxu0 %v82
    %125 = vmatprep.subr.mxu0 0.0
    %126 = vmatpush1.msra.mxu0 %v81
    %127 = vmatprep.subr.mxu0 0.0
    %128 = vmatpush1.msra.mxu0 %v80
    %129 = vmatprep.subr.mxu0 0.0
    %130 = vmatpush1.msra.mxu0 %v79
    %131 = vmatprep.subr.mxu0 0.0
    %132 = vmatpush1.msra.mxu0 %v78
    %133 = vmatprep.subr.mxu0 0.0
    %134 = vmatpush2.msra.mxu0 0.0
    %135 = vmatprep.subr.mxu0 0.0
    %136 = vmatpush2.msra.mxu0 0.0
    %137 = vmatprep.subr.mxu0 0.0
    %138 = vmatpush2.msra.mxu0 0.0
    %139 = vmatprep.subr.mxu0 0.0
    %140 = vmatpush2.msra.mxu0 0.0
    %141 = vmatprep.subr.mxu0 0.0
    %142 = vmatpush2.msra.mxu0 0.0
    %143 = vmatprep.subr.mxu0 0.0
    %144 = vmatpush2.msra.mxu0 0.0
    %145 = vmatprep.subr.mxu0 0.0
    %146 = vmatpush2.msra.mxu0 0.0
    %147 = vmatprep.subr.mxu0 0.0
    %148 = vmatpush2.msra.mxu0 0.0
    %149 = vmatprep.subr.mxu0 0.0
    %150 = vmatpush2.msra.mxu0 0.0
    %151 = vmatprep.subr.mxu0 0.0
    %152 = vmatpush2.msra.mxu0 0.0
    %153 = vmatprep.subr.mxu0 0.0
    %154 = vmatpush2.msra.mxu0 0.0
    %155 = vmatprep.subr.mxu0 0.0
    %156 = vmatpush2.msra.mxu0 0.0
    %157 = vmatprep.subr.mxu0 0.0
    %158 = vmatpush2.msra.mxu0 0.0
    %159 = vmatprep.subr.mxu0 0.0
    %160 = vmatpush2.msra.mxu0 0.0
    %161 = vmatprep.subr.mxu0 0.0
    %162 = vmatpush2.msra.mxu0 0.0
    %163 = vmatprep.subr.mxu0 0.0
    %164 = vmatpush2.msra.mxu0 0.0
    %165 = vmatprep.mubr.f32.mxu0 0.0
    %166 = vmatmul.mubr.f32.gmra.mxu0 %v77
    %v167 = vpop.f32.mrf.mxu0
    %v168 = vadd.f32 %v99, %v167
    %v169 = vpop.f32.mrf.mxu0
    %170 = vdwg.mxu0
    %v171 = vmax.f32 %v168, 0.0
    %v172 = vld [vmem:[#allocation5] sm:$0xff]
    %v173 = vld [vmem:[#allocation5 + $0x8] sm:$0xff]
    %v174 = vld [vmem:[#allocation5 + $0x10] sm:$0xff]
    %v175 = vld [vmem:[#allocation5 + $0x18] sm:$0xff]
    %v176 = vld [vmem:[#allocation5 + $0x20] sm:$0xff]
    %v177 = vld [vmem:[#allocation5 + $0x28] sm:$0xff]
    %v178 = vld [vmem:[#allocation5 + $0x30] sm:$0xff]
    %v179 = vld [vmem:[#allocation5 + $0x38] sm:$0xff]
    %v180 = vld [vmem:[#allocation5 + $0x40] sm:$0xff]
    %v181 = vld [vmem:[#allocation5 + $0x48] sm:$0xff]
    %v182 = vld [vmem:[#allocation5 + $0x50] sm:$0xff]
    %v183 = vld [vmem:[#allocation5 + $0x58] sm:$0xff]
    %v184 = vld [vmem:[#allocation5 + $0x60] sm:$0xff]
    %v185 = vld [vmem:[#allocation5 + $0x68] sm:$0xff]
    %v186 = vld [vmem:[#allocation5 + $0x70] sm:$0xff]
    %v187 = vld [vmem:[#allocation5 + $0x78] sm:$0xff]
    %v188 = vld [vmem:[%s6] sm:$0x1]
    %v190 = vlaneseq
    %v191 = vshrl.u32 %v190, 7
    %v192 = vsub.s32 0, %v191
    %v193 = vrot.slane %v188, %v192
    %195 = vmatprep.subr.mxu0 0.0
    %196 = vmatpush1.msra.mxu0 %v187
    %197 = vmatprep.subr.mxu0 0.0
    %198 = vmatpush1.msra.mxu0 %v186
    %199 = vmatprep.subr.mxu0 0.0
    %200 = vmatpush1.msra.mxu0 %v185
    %201 = vmatprep.subr.mxu0 0.0
    %202 = vmatpush1.msra.mxu0 %v184
    %203 = vmatprep.subr.mxu0 0.0
    %204 = vmatpush1.msra.mxu0 %v183
    %205 = vmatprep.subr.mxu0 0.0
    %206 = vmatpush1.msra.mxu0 %v182
    %207 = vmatprep.subr.mxu0 0.0
    %208 = vmatpush1.msra.mxu0 %v181
    %209 = vmatprep.subr.mxu0 0.0
    %210 = vmatpush1.msra.mxu0 %v180
    %211 = vmatprep.subr.mxu0 0.0
    %212 = vmatpush1.msra.mxu0 %v179
    %213 = vmatprep.subr.mxu0 0.0
    %214 = vmatpush1.msra.mxu0 %v178
    %215 = vmatprep.subr.mxu0 0.0
    %216 = vmatpush1.msra.mxu0 %v177
    %217 = vmatprep.subr.mxu0 0.0
    %218 = vmatpush1.msra.mxu0 %v176
    %219 = vmatprep.subr.mxu0 0.0
    %220 = vmatpush1.msra.mxu0 %v175
    %221 = vmatprep.subr.mxu0 0.0
    %222 = vmatpush1.msra.mxu0 %v174
    %223 = vmatprep.subr.mxu0 0.0
    %224 = vmatpush1.msra.mxu0 %v173
    %225 = vmatprep.subr.mxu0 0.0
    %226 = vmatpush1.msra.mxu0 %v172
    %227 = vmatprep.subr.mxu0 0.0
    %228 = vmatpush2.msra.mxu0 0.0
    %229 = vmatprep.subr.mxu0 0.0
    %230 = vmatpush2.msra.mxu0 0.0
    %231 = vmatprep.subr.mxu0 0.0
    %232 = vmatpush2.msra.mxu0 0.0
    %233 = vmatprep.subr.mxu0 0.0
    %234 = vmatpush2.msra.mxu0 0.0
    %235 = vmatprep.subr.mxu0 0.0
    %236 = vmatpush2.msra.mxu0 0.0
    %237 = vmatprep.subr.mxu0 0.0
    %238 = vmatpush2.msra.mxu0 0.0
    %239 = vmatprep.subr.mxu0 0.0
    %240 = vmatpush2.msra.mxu0 0.0
    %241 = vmatprep.subr.mxu0 0.0
    %242 = vmatpush2.msra.mxu0 0.0
    %243 = vmatprep.subr.mxu0 0.0
    %244 = vmatpush2.msra.mxu0 0.0
    %245 = vmatprep.subr.mxu0 0.0
    %246 = vmatpush2.msra.mxu0 0.0
    %247 = vmatprep.subr.mxu0 0.0
    %248 = vmatpush2.msra.mxu0 0.0
    %249 = vmatprep.subr.mxu0 0.0
    %250 = vmatpush2.msra.mxu0 0.0
    %251 = vmatprep.subr.mxu0 0.0
    %252 = vmatpush2.msra.mxu0 0.0
    %253 = vmatprep.subr.mxu0 0.0
    %254 = vmatpush2.msra.mxu0 0.0
    %255 = vmatprep.subr.mxu0 0.0
    %256 = vmatpush2.msra.mxu0 0.0
    %257 = vmatprep.subr.mxu0 0.0
    %258 = vmatpush2.msra.mxu0 0.0
    %259 = vmatprep.mubr.f32.mxu0 0.0
    %260 = vmatmul.mubr.f32.gmra.mxu0 %v171
    %v261 = vpop.f32.mrf.mxu0
    %v262 = vadd.f32 %v193, %v261
    %v263 = vpop.f32.mrf.mxu0
    %264 = vdwg.mxu0
    %265 = vst [vmem:[#allocation7] sm:$0xff] %v262
    // Predicated region
    $region38: #{tpu_custom_call.1} parent=1 // pred_check
      _
    $region39: #{tpu_custom_call.1} parent=1 // pred_check_branch
      %267 = sbr.rel (0) target = $region41
    $region40: #{tpu_custom_call.1} parent=1 // pred_region
      %s269 = ssub.s32 128, 128
      %270 = vsyncadd [#allocation4], %s269
      %s272 = sshll.u32 [#allocation7], 4
      %s273 = int_to_ptr.vmem [resolvable:$true] %s272
      %275 = dma.vmem_to_hbm [thread:$0]  %s273, 128, %s7, [#allocation4]
    $region41: #{tpu_custom_call.1} parent=1 // pred_fallthru
      _
    // Predicated region
    $region42: #{tpu_custom_call.1} parent=1 // pred_check
      _
    $region43: #{tpu_custom_call.1} parent=1 // pred_check_branch
      %277 = sbr.rel (0) target = $region45
    $region44: #{tpu_custom_call.1} parent=1 // pred_region
      %278 = dma.done [#allocation4], 128
    $region45: #{tpu_custom_call.1} parent=1 // pred_fallthru
      _
    %279 = vsyncpa [#allocation3], 1
    %280 = vsyncpa [#allocation6], 1
    %281 = vsyncpa [#allocation4], 1

</llo_original>
